<compile_context>
chip_gen: v7x
topology: tpu7x:2x2x1
jax: 0.10.0
libtpu: 0.0.40
codegen_flags: <defaults>
</compile_context>

<pallas_src>
import math

import jax
import jax.numpy as jnp
from jax.experimental import pallas as pl
from jax.experimental.pallas import tpu as pltpu


def _round_up(x, m):
    return ((x + m - 1) // m) * m


def _linear_kernel(x_ref, w_ref, b_ref, o_ref):
    # One (tm, P_pad) tile of tokens times the full (P_pad, E_pad) weight.
    # bf16 inputs -> MXU with f32 accumulation; bias add + store in f32.
    acc = jnp.dot(x_ref[...], w_ref[...], preferred_element_type=jnp.float32)
    o_ref[...] = (acc + b_ref[...]).astype(o_ref.dtype)


def patch_linear(patches, weight, bias, *, compute_dtype=jnp.bfloat16):
    """(M, P) @ (P, E) + (E,) on the MXU, with lane-dense padded tiles.

    patches : (M, P) float32
    weight  : (E, P) float32  (PyTorch nn.Linear layout)
    bias    : (E,)   float32
    returns : (M, E) float32

    Intended to be called from inside a jit so the pad/cast below fuse into
    the producer of `patches` and the trailing slice fuses into its consumer.
    """
    M, P = patches.shape
    E, P2 = weight.shape
    assert P == P2

    # Lane-dense padding of the contraction and output dims (128, not 256:
    # the kernel is memory-bound, bigger MXU tiles would only add bytes).
    P_pad = _round_up(P, 128)
    E_pad = _round_up(E, 128)

    # Row tiling.
    #  - Big tiles (up to 2048 rows, VMEM-budgeted) to amortize per-grid-step
    #    pipeline overhead on the single-TC chips (v5e / v6e).
    #  - If more than one 128-row tile of work exists, force an EVEN grid
    #    length so v7x megacore shards the "parallel" axis evenly across its
    #    two TensorCores.
    m128 = _round_up(M, 128)
    bytes_per_row = P_pad * 2 + E_pad * 4            # bf16 input + f32 output
    vmem_budget = 12 * 1024 * 1024                   # headroom under 16 MiB scoped default
    tm_cap = max(128, min(2048, (vmem_budget // (2 * bytes_per_row)) // 128 * 128))

    if m128 <= 128:
        tm = m128
        grid_m = 1
    else:
        n_pairs = -(-m128 // (2 * tm_cap))           # ceil
        grid_m = 2 * n_pairs                         # even, >= 2
        tm = _round_up(-(-m128 // grid_m), 128)      # per-step rows, 128-aligned
    M_pad = tm * grid_m

    x = patches
    if P_pad != P or M_pad != M:
        x = jnp.pad(x, ((0, M_pad - M), (0, P_pad - P)))
    # Cast at the boundary: under the enclosing jit this fuses with the
    # patchification transpose/pad fusion, and halves the kernel's input DMA.
    x = x.astype(compute_dtype)

    w_t = jnp.pad(weight.T, ((0, P_pad - P), (0, E_pad - E)))   # (P_pad, E_pad)
    w_t = w_t.astype(compute_dtype)
    b = jnp.pad(bias, (0, E_pad - E)).reshape(1, E_pad).astype(jnp.float32)

    cost = pl.CostEstimate(
        flops=2 * M_pad * P_pad * E_pad,
        transcendentals=0,
        bytes_accessed=(M_pad * P_pad * 2            # bf16 patches in
                        + P_pad * E_pad * 2          # bf16 weight in
                        + E_pad * 4                  # f32 bias in
                        + M_pad * E_pad * 4),        # f32 output
    )

    out = pl.pallas_call(
        _linear_kernel,
        out_shape=jax.ShapeDtypeStruct((M_pad, E_pad), jnp.float32),
        grid=(grid_m,),
        in_specs=[
            pl.BlockSpec((tm, P_pad), lambda i: (i, 0)),
            pl.BlockSpec((P_pad, E_pad), lambda i: (0, 0)),
            pl.BlockSpec((1, E_pad), lambda i: (0, 0)),
        ],
        out_specs=pl.BlockSpec((tm, E_pad), lambda i: (i, 0)),
        compiler_params=pltpu.CompilerParams(
            dimension_semantics=("parallel",)),
        cost_estimate=cost,
    )(x, w_t, b)

    # Slice back to logical shape; under the enclosing jit this fuses with the
    # consumer reshape instead of being its own HBM pass.
    return out[:M, :E]


class PatchEmbedding:
    """JAX/Pallas port of the PyTorch PatchEmbedding module."""

    def __init__(self, patch_size=10, emb_dim=32, max_length=256,
                 img_channels=1, key=None):
        self.patch_size = patch_size
        self.emb_dim = emb_dim
        self.max_length = max_length
        self.img_channels = img_channels
        in_features = patch_size * patch_size * img_channels
        if key is None:
            key = jax.random.PRNGKey(0)
        kw, kb = jax.random.split(key)
        # Deterministic init mirroring nn.Linear: U(-1/sqrt(P), 1/sqrt(P)).
        bound = 1.0 / math.sqrt(in_features)
        self.weight = jax.random.uniform(
            kw, (emb_dim, in_features), jnp.float32, -bound, bound)  # (E, P)
        self.bias = jax.random.uniform(
            kb, (emb_dim,), jnp.float32, -bound, bound)              # (E,)
        # One jit over the WHOLE forward so patchification transpose, the
        # pad/bf16-cast feeding the kernel, and the trailing slice/reshape all
        # fuse around the pallas_call (no standalone wrapper HBM passes).
        self._forward = jax.jit(self._forward_impl)

    def to_patch(self, x):
        ps = self.patch_size
        B, C, H, W = x.shape
        num_patches = (H // ps) * (W // ps)
        if num_patches > self.max_length:
            raise ValueError(
                "The number of patches required to cover the image of size "
                f"{(C, H, W)} is greater than the maximum length of the "
                f"sequence {self.max_length}.")
        pad_h = (ps - H % ps) % ps
        pad_w = (ps - W % ps) % ps
        x = jnp.pad(x, ((0, 0), (0, 0), (0, pad_h), (0, pad_w)))
        Hp, Wp = H + pad_h, W + pad_w
        nh, nw = Hp // ps, Wp // ps

        # torch.ones(B, Hp//ps, Wp//ps); the subsequent F.pad by pad//ps is
        # always a no-op because pad < patch_size.
        attention_mask = jnp.ones((B, nh * nw), jnp.float32)

        # Matches torch: arange(0, Hp, ps) / (Hp - 1); no guard, like PyTorch.
        y_pos = jnp.arange(0, Hp, ps, dtype=jnp.float32) / (Hp - 1)
        x_pos = jnp.arange(0, Wp, ps, dtype=jnp.float32) / (Wp - 1)

        # unfold(2).unfold(3) -> permute -> flatten; feature order (c, ph, pw).
        x = x.reshape(B, C, nh, ps, nw, ps)
        x = jnp.transpose(x, (0, 2, 4, 1, 3, 5))       # (B, nh, nw, C, ps, ps)
        x = x.reshape(B, nh * nw, C * ps * ps)

        n = nh * nw
        if n < self.max_length:
            x = jnp.pad(x, ((0, 0), (0, self.max_length - n), (0, 0)))
            attention_mask = jnp.pad(
                attention_mask, ((0, 0), (0, self.max_length - n)))
        y_pos = jnp.pad(y_pos, (0, self.max_length - y_pos.shape[0]),
                        constant_values=-1.0)
        x_pos = jnp.pad(x_pos, (0, self.max_length - x_pos.shape[0]),
                        constant_values=-1.0)
        return x, attention_mask, x_pos[None, :], y_pos[None, :]

    def _forward_impl(self, x, weight, bias):
        patches, attention_mask, x_pos, y_pos = self.to_patch(x)
        B, L, P = patches.shape
        out = patch_linear(patches.reshape(B * L, P), weight, bias)
        out = out.reshape(B, L, self.emb_dim)
        return out, attention_mask, x_pos, y_pos

    def __call__(self, x):
        return self._forward(x, self.weight, self.bias)


if __name__ == "__main__":
    key = jax.random.PRNGKey(0)
    k_img, k_params = jax.random.split(key)

    # Small shapes consistent with the module: B=2, C=4, H=W=16,
    # patch_size=4 -> 16 patches of 64 features, max_length=32, emb_dim=32.
    x = jax.random.normal(k_img, (2, 4, 16, 16), jnp.float32)
    module = PatchEmbedding(patch_size=4, emb_dim=32, max_length=32,
                            img_channels=4, key=k_params)

    emb, attn_mask, x_pos, y_pos = module(x)
    emb = jax.block_until_ready(emb)
    jax.block_until_ready((attn_mask, x_pos, y_pos))

    assert emb.shape == (2, 32, 32)
    assert attn_mask.shape == (2, 32)
    assert x_pos.shape == (1, 32) and y_pos.shape == (1, 32)

    # Sanity checks of the linear hot path.
    patches, _, _, _ = module.to_patch(x)
    p2 = patches.reshape(-1, patches.shape[-1])

    # (a) tight check against a reference that matches the kernel's numerics
    #     (bf16-rounded inputs, f32 accumulation, f32 bias add).
    ref_bf16 = (
        p2.astype(jnp.bfloat16).astype(jnp.float32)
        @ module.weight.T.astype(jnp.bfloat16).astype(jnp.float32)
        + module.bias
    ).reshape(2, 32, 32)
    assert jnp.allclose(emb, ref_bf16, atol=1e-3, rtol=1e-3)

    # (b) loose check against the pure-f32 reference (bf16 input rounding).
    ref_f32 = (p2 @ module.weight.T + module.bias).reshape(2, 32, 32)
    assert jnp.allclose(emb, ref_f32, atol=5e-2, rtol=5e-2)

    print("KERNEL_OK")
</pallas_src>

<mosaic_0001>
module attributes {stable_mosaic.version = 11 : i64} {
  func.func @_linear_kernel(%arg0: i32, %arg1: memref<128x128xbf16, #tpu.memory_space<vmem>>, %arg2: memref<128x128xbf16, #tpu.memory_space<vmem>>, %arg3: memref<1x128xf32, #tpu.memory_space<vmem>>, %arg4: memref<128x128xf32, #tpu.memory_space<vmem>>) attributes {dimension_semantics = [#tpu.dimension_semantics<parallel>], iteration_bounds = array<i64: 1>, scalar_prefetch = 0 : i64, scratch_operands = 0 : i64, tpu.core_type = #tpu.core_type<tc>, window_params = [{transform_indices = @transform_0, window_bounds = array<i64: 128, 128>}, {pipeline_mode = #tpu.pipeline_mode<synchronous>, transform_indices = @transform_1, window_bounds = array<i64: 128, 128>}, {pipeline_mode = #tpu.pipeline_mode<synchronous>, transform_indices = @transform_2, window_bounds = array<i64: 1, 128>}, {transform_indices = @transform_3, window_bounds = array<i64: 128, 128>}]} {
    %c0 = arith.constant 0 : index
    %c0_0 = arith.constant 0 : index
    %0 = vector.load %arg1[%c0, %c0_0] : memref<128x128xbf16, #tpu.memory_space<vmem>>, vector<128x128xbf16>
    %c0_1 = arith.constant 0 : index
    %c0_2 = arith.constant 0 : index
    %1 = vector.load %arg2[%c0_1, %c0_2] : memref<128x128xbf16, #tpu.memory_space<vmem>>, vector<128x128xbf16>
    %cst = arith.constant dense<0.000000e+00> : vector<128x128xf32>
    %2 = tpu.matmul %0, %1, %cst {dimension_numbers = #tpu.dot_dimension_numbers<[1], [0], [0], [1], [0, 0, 1, 1], [], []>} : vector<128x128xbf16>, vector<128x128xbf16>, vector<128x128xf32> -> vector<128x128xf32>
    %c0_3 = arith.constant 0 : index
    %c0_4 = arith.constant 0 : index
    %3 = vector.load %arg3[%c0_3, %c0_4] : memref<1x128xf32, #tpu.memory_space<vmem>>, vector<1x128xf32>
    %4 = vector.broadcast %3 : vector<1x128xf32> to vector<128x128xf32>
    %5 = arith.addf %2, %4 : vector<128x128xf32>
    %c0_5 = arith.constant 0 : index
    %c0_6 = arith.constant 0 : index
    %6 = vector.load %arg4[%c0_5, %c0_6] : memref<128x128xf32, #tpu.memory_space<vmem>>, vector<128x128xf32>
    tpu.vector_store %arg4[%c0_5, %c0_6], %5 {strides = array<i32>} : memref<128x128xf32, #tpu.memory_space<vmem>>, vector<128x128xf32>,
    return
  }
  func.func @transform_0(%arg0: i32) -> (i32, i32) {
    %c0_i32 = arith.constant 0 : i32
    %c0_i32_0 = arith.constant 0 : i32
    return %arg0, %c0_i32 : i32, i32
  }
  func.func @transform_1(%arg0: i32) -> (i32, i32) {
    %c0_i32 = arith.constant 0 : i32
    %c0_i32_0 = arith.constant 0 : i32
    %c0_i32_1 = arith.constant 0 : i32
    return %c0_i32, %c0_i32_0 : i32, i32
  }
  func.func @transform_2(%arg0: i32) -> (i32, i32) {
    %c0_i32 = arith.constant 0 : i32
    %c0_i32_0 = arith.constant 0 : i32
    %c0_i32_1 = arith.constant 0 : i32
    return %c0_i32, %c0_i32_0 : i32, i32
  }
  func.func @transform_3(%arg0: i32) -> (i32, i32) {
    %c0_i32 = arith.constant 0 : i32
    %c0_i32_0 = arith.constant 0 : i32
    return %arg0, %c0_i32 : i32, i32
  }
}

</mosaic_0001>

<llo_original>
// kernel: _forward_impl.1
$region0: #{_forward_impl.1}
  #allocation0 [shape = 'u32[]', space=smem, size = 0x4, offset = 0x4, fixed_abs, tag = 'smem constant byte address 0x4 - core index']
  #allocation1 [shape = 'u32[144,128]{1,0:T(1,128)}', space=vmem, size = 0x12000, scoped, tag = 'internal scratch']
  %s0 = inlined_call_operand.vmem [shape: bf16[128,128], index: 0, kind: input, shape index: {}]
  %s1 = inlined_call_operand.vmem [shape: bf16[128,128], index: 1, kind: input, shape index: {}]
  %s2 = inlined_call_operand.vmem [shape: f32[1,128], index: 2, kind: input, shape index: {}]
  %s3 = inlined_call_operand.vmem [shape: f32[128,128], index: 3, kind: output, shape index: {}]
  %s4 = sld [smem:[#allocation0]]
  $region22: #{_forward_impl.1} parent=0
    _
  %s6 = ssub.s32 1, %s4
  %s7 = scalar_select 0, %s6, %s4
  // Predicated region
  $region2: #{_forward_impl.1} parent=0 // pred_check
    _
  $region3: #{_forward_impl.1} parent=0 // pred_check_branch
    %9 = sbr.rel (0) target = $region5
  $region4: #{_forward_impl.1} parent=0 // pred_region
    _
  $region5: #{_forward_impl.1} parent=0 // pred_fallthru
    _
  // Predicated region
  $region6: #{_forward_impl.1} parent=0 // pred_check
    _
  $region7: #{_forward_impl.1} parent=0 // pred_check_branch
    %11 = sbr.rel (0) target = $region9
  $region8: #{_forward_impl.1} parent=0 // pred_region
    _
  $region9: #{_forward_impl.1} parent=0 // pred_fallthru
    _
  // Predicated region
  $region10: #{_forward_impl.1} parent=0 // pred_check
    _
  $region11: #{_forward_impl.1} parent=0 // pred_check_branch
    %13 = sbr.rel (0) target = $region13
  $region12: #{_forward_impl.1} parent=0 // pred_region
    _
  $region13: #{_forward_impl.1} parent=0 // pred_fallthru
    _
  %v15 = vld [vmem:[%s0] sm:$0xf]
  %v16 = vld [vmem:[%s0 + $0x4] sm:$0xf]
  %v17 = vld [vmem:[%s0 + $0x8] sm:$0xf]
  %v18 = vld [vmem:[%s0 + $0xc] sm:$0xf]
  %v19 = vld [vmem:[%s0 + $0x10] sm:$0xf]
  %v20 = vld [vmem:[%s0 + $0x14] sm:$0xf]
  %v21 = vld [vmem:[%s0 + $0x18] sm:$0xf]
  %v22 = vld [vmem:[%s0 + $0x1c] sm:$0xf]
  %v23 = vld [vmem:[%s0 + $0x20] sm:$0xf]
  %v24 = vld [vmem:[%s0 + $0x24] sm:$0xf]
  %v25 = vld [vmem:[%s0 + $0x28] sm:$0xf]
  %v26 = vld [vmem:[%s0 + $0x2c] sm:$0xf]
  %v27 = vld [vmem:[%s0 + $0x30] sm:$0xf]
  %v28 = vld [vmem:[%s0 + $0x34] sm:$0xf]
  %v29 = vld [vmem:[%s0 + $0x38] sm:$0xf]
  %v30 = vld [vmem:[%s0 + $0x3c] sm:$0xf]
  %v31 = vld [vmem:[%s1] sm:$0xf]
  %v32 = vld [vmem:[%s1 + $0x4] sm:$0xf]
  %v33 = vld [vmem:[%s1 + $0x8] sm:$0xf]
  %v34 = vld [vmem:[%s1 + $0xc] sm:$0xf]
  %v35 = vld [vmem:[%s1 + $0x10] sm:$0xf]
  %v36 = vld [vmem:[%s1 + $0x14] sm:$0xf]
  %v37 = vld [vmem:[%s1 + $0x18] sm:$0xf]
  %v38 = vld [vmem:[%s1 + $0x1c] sm:$0xf]
  %v39 = vld [vmem:[%s1 + $0x20] sm:$0xf]
  %v40 = vld [vmem:[%s1 + $0x24] sm:$0xf]
  %v41 = vld [vmem:[%s1 + $0x28] sm:$0xf]
  %v42 = vld [vmem:[%s1 + $0x2c] sm:$0xf]
  %v43 = vld [vmem:[%s1 + $0x30] sm:$0xf]
  %v44 = vld [vmem:[%s1 + $0x34] sm:$0xf]
  %v45 = vld [vmem:[%s1 + $0x38] sm:$0xf]
  %v46 = vld [vmem:[%s1 + $0x3c] sm:$0xf]
  %v47 = vld [vmem:[%s2] sm:$0x1]
  %v49 = vlaneseq
  %v50 = vshrl.u32 %v49, 7
  %v51 = vsub.s32 0, %v50
  %v52 = vrot.slane %v47, %v51
  %v70 = vunpack.c.l.b16 %v15
  %v71 = vunpack.c.l.b16 %v16
  %v72 = vunpack.c.l.b16 %v17
  %v73 = vunpack.c.l.b16 %v18
  %v74 = vunpack.c.l.b16 %v19
  %v75 = vunpack.c.l.b16 %v20
  %v76 = vunpack.c.l.b16 %v21
  %v77 = vunpack.c.l.b16 %v22
  %v78 = vunpack.c.l.b16 %v23
  %v79 = vunpack.c.l.b16 %v24
  %v80 = vunpack.c.l.b16 %v25
  %v81 = vunpack.c.l.b16 %v26
  %v82 = vunpack.c.l.b16 %v27
  %v83 = vunpack.c.l.b16 %v28
  %v84 = vunpack.c.l.b16 %v29
  %v85 = vunpack.c.l.b16 %v30
  %v86 = vpack.c.b16 %v71, %v70
  %v87 = vpack.c.b16 %v73, %v72
  %v88 = vpack.c.b16 %v75, %v74
  %v89 = vpack.c.b16 %v77, %v76
  %v90 = vpack.c.b16 %v79, %v78
  %v91 = vpack.c.b16 %v81, %v80
  %v92 = vpack.c.b16 %v83, %v82
  %v93 = vpack.c.b16 %v85, %v84
  %v118 = vunpack.c.l.b16 %v31
  %v119 = vunpack.c.l.b16 %v32
  %v120 = vunpack.c.l.b16 %v33
  %v121 = vunpack.c.l.b16 %v34
  %v122 = vunpack.c.l.b16 %v35
  %v123 = vunpack.c.l.b16 %v36
  %v124 = vunpack.c.l.b16 %v37
  %v125 = vunpack.c.l.b16 %v38
  %v126 = vunpack.c.l.b16 %v39
  %v127 = vunpack.c.l.b16 %v40
  %v128 = vunpack.c.l.b16 %v41
  %v129 = vunpack.c.l.b16 %v42
  %v130 = vunpack.c.l.b16 %v43
  %v131 = vunpack.c.l.b16 %v44
  %v132 = vunpack.c.l.b16 %v45
  %v133 = vunpack.c.l.b16 %v46
  %v134 = vpack.c.b16 %v119, %v118
  %v135 = vpack.c.b16 %v121, %v120
  %v136 = vpack.c.b16 %v123, %v122
  %v137 = vpack.c.b16 %v125, %v124
  %v138 = vpack.c.b16 %v127, %v126
  %v139 = vpack.c.b16 %v129, %v128
  %v140 = vpack.c.b16 %v131, %v130
  %v141 = vpack.c.b16 %v133, %v132
  %150 = vmatprep.subr.bf16.mxu0 0
  %151 = vmatpush1.bf16.msra.mxu0 %v134
  %152 = vmatprep.subr.bf16.mxu0 0
  %153 = vmatpush1.bf16.msra.mxu0 %v135
  %154 = vmatprep.subr.bf16.mxu0 0
  %155 = vmatpush1.bf16.msra.mxu0 %v136
  %156 = vmatprep.subr.bf16.mxu0 0
  %157 = vmatpush1.bf16.msra.mxu0 %v137
  %158 = vmatprep.subr.bf16.mxu0 0
  %159 = vmatpush1.bf16.msra.mxu0 %v138
  %160 = vmatprep.subr.bf16.mxu0 0
  %161 = vmatpush1.bf16.msra.mxu0 %v139
  %162 = vmatprep.subr.bf16.mxu0 0
  %163 = vmatpush1.bf16.msra.mxu0 %v140
  %164 = vmatprep.subr.bf16.mxu0 0
  %165 = vmatpush1.bf16.msra.mxu0 %v141
  %166 = vmatprep.subr.bf16.mxu0 0
  %167 = vmatpush1.bf16.msra.mxu0 0
  %168 = vmatprep.subr.bf16.mxu0 0
  %169 = vmatpush1.bf16.msra.mxu0 0
  %170 = vmatprep.subr.bf16.mxu0 0
  %171 = vmatpush1.bf16.msra.mxu0 0
  %172 = vmatprep.subr.bf16.mxu0 0
  %173 = vmatpush1.bf16.msra.mxu0 0
  %174 = vmatprep.subr.bf16.mxu0 0
  %175 = vmatpush1.bf16.msra.mxu0 0
  %176 = vmatprep.subr.bf16.mxu0 0
  %177 = vmatpush1.bf16.msra.mxu0 0
  %178 = vmatprep.subr.bf16.mxu0 0
  %179 = vmatpush1.bf16.msra.mxu0 0
  %180 = vmatprep.subr.bf16.mxu0 0
  %181 = vmatpush1.bf16.msra.mxu0 0
  %182 = vmatprep.mubr.bf16.mxu0 0
  %183 = vmatmul.mubr.bf16.gmra.mrb[0].mxu0 %v86
  %v184 = vpop.f32.mrb[0].mxu0
  %v185 = vadd.f32 %v52, %v184
  %v186 = vpop.f32.mrb[0].mxu0
  %v187 = vpop.f32.mrb[0].mxu0
  %v188 = vadd.f32 %v52, %v187
  %v189 = vpop.f32.mrb[0].mxu0
  %190 = vmatprep.mubr.bf16.mxu0 0
  %191 = vmatmul.mubr.bf16.gmra.mrb[0].mxu0 %v87
  %v192 = vpop.f32.mrb[0].mxu0
  %v193 = vadd.f32 %v52, %v192
  %v194 = vpop.f32.mrb[0].mxu0
  %v195 = vpop.f32.mrb[0].mxu0
  %v196 = vadd.f32 %v52, %v195
  %v197 = vpop.f32.mrb[0].mxu0
  %198 = vmatprep.mubr.bf16.mxu0 0
  %199 = vmatmul.mubr.bf16.gmra.mrb[0].mxu0 %v88
  %v200 = vpop.f32.mrb[0].mxu0
  %v201 = vadd.f32 %v52, %v200
  %v202 = vpop.f32.mrb[0].mxu0
  %v203 = vpop.f32.mrb[0].mxu0
  %v204 = vadd.f32 %v52, %v203
  %v205 = vpop.f32.mrb[0].mxu0
  %206 = vmatprep.mubr.bf16.mxu0 0
  %207 = vmatmul.mubr.bf16.gmra.mrb[0].mxu0 %v89
  %v208 = vpop.f32.mrb[0].mxu0
  %v209 = vadd.f32 %v52, %v208
  %v210 = vpop.f32.mrb[0].mxu0
  %v211 = vpop.f32.mrb[0].mxu0
  %v212 = vadd.f32 %v52, %v211
  %v213 = vpop.f32.mrb[0].mxu0
  %214 = vmatprep.mubr.bf16.mxu0 0
  %215 = vmatmul.mubr.bf16.gmra.mrb[0].mxu0 %v90
  %v216 = vpop.f32.mrb[0].mxu0
  %v217 = vadd.f32 %v52, %v216
  %v218 = vpop.f32.mrb[0].mxu0
  %v219 = vpop.f32.mrb[0].mxu0
  %v220 = vadd.f32 %v52, %v219
  %v221 = vpop.f32.mrb[0].mxu0
  %222 = vmatprep.mubr.bf16.mxu0 0
  %223 = vmatmul.mubr.bf16.gmra.mrb[0].mxu0 %v91
  %v224 = vpop.f32.mrb[0].mxu0
  %v225 = vadd.f32 %v52, %v224
  %v226 = vpop.f32.mrb[0].mxu0
  %v227 = vpop.f32.mrb[0].mxu0
  %v228 = vadd.f32 %v52, %v227
  %v229 = vpop.f32.mrb[0].mxu0
  %230 = vmatprep.mubr.bf16.mxu0 0
  %231 = vmatmul.mubr.bf16.gmra.mrb[0].mxu0 %v92
  %v232 = vpop.f32.mrb[0].mxu0
  %v233 = vadd.f32 %v52, %v232
  %v234 = vpop.f32.mrb[0].mxu0
  %v235 = vpop.f32.mrb[0].mxu0
  %v236 = vadd.f32 %v52, %v235
  %v237 = vpop.f32.mrb[0].mxu0
  %238 = vmatprep.mubr.bf16.mxu0 0
  %239 = vmatmul.mubr.bf16.gmra.mrb[0].mxu0 %v93
  %v240 = vpop.f32.mrb[0].mxu0
  %v241 = vadd.f32 %v52, %v240
  %v242 = vpop.f32.mrb[0].mxu0
  %v243 = vpop.f32.mrb[0].mxu0
  %v244 = vadd.f32 %v52, %v243
  %v245 = vpop.f32.mrb[0].mxu0
  %246 = vdwg.mxu0
  %247 = vst [vmem:[%s3] sm:$0xff] %v185
  %248 = vst [vmem:[%s3 + $0x8] sm:$0xff] %v188
  %249 = vst [vmem:[%s3 + $0x10] sm:$0xff] %v193
  %250 = vst [vmem:[%s3 + $0x18] sm:$0xff] %v196
  %251 = vst [vmem:[%s3 + $0x20] sm:$0xff] %v201
  %252 = vst [vmem:[%s3 + $0x28] sm:$0xff] %v204
  %253 = vst [vmem:[%s3 + $0x30] sm:$0xff] %v209
  %254 = vst [vmem:[%s3 + $0x38] sm:$0xff] %v212
  %255 = vst [vmem:[%s3 + $0x40] sm:$0xff] %v217
  %256 = vst [vmem:[%s3 + $0x48] sm:$0xff] %v220
  %257 = vst [vmem:[%s3 + $0x50] sm:$0xff] %v225
  %258 = vst [vmem:[%s3 + $0x58] sm:$0xff] %v228
  %259 = vst [vmem:[%s3 + $0x60] sm:$0xff] %v233
  %260 = vst [vmem:[%s3 + $0x68] sm:$0xff] %v236
  %261 = vst [vmem:[%s3 + $0x70] sm:$0xff] %v241
  %262 = vst [vmem:[%s3 + $0x78] sm:$0xff] %v244
  // Predicated region
  $region14: #{_forward_impl.1} parent=0 // pred_check
    _
  $region15: #{_forward_impl.1} parent=0 // pred_check_branch
    %264 = sbr.rel (0) target = $region17
  $region16: #{_forward_impl.1} parent=0 // pred_region
    _
  $region17: #{_forward_impl.1} parent=0 // pred_fallthru
    _
  // Predicated region
  $region18: #{_forward_impl.1} parent=0 // pred_check
    _
  $region19: #{_forward_impl.1} parent=0 // pred_check_branch
    %266 = sbr.rel (0) target = $region21
  $region20: #{_forward_impl.1} parent=0 // pred_region
    _
  $region21: #{_forward_impl.1} parent=0 // pred_fallthru
    _

</llo_original>
